<compile_context>
chip_gen: v7x
topology: tpu7x:2x2x1
jax: 0.10.0
libtpu: 0.0.40
codegen_flags: <defaults>
</compile_context>

<pallas_src>
import jax
import jax.numpy as jnp
from jax import lax
from jax.experimental import pallas as pl
from jax.experimental.pallas import tpu as pltpu


# ----------------------------- Pallas kernel ------------------------------- #
def bilstm_recurrence_kernel(xp_ref,    # [T, B, 4H] f32   x@W_ih.T + (b_ih+b_hh)
                             mask_ref,  # [T, B, 1]  f32   1.0 while t < length[b]
                             whh_ref,   # [H, 4H]    bf16  W_hh.T (h @ whh -> gates i,f,g,o)
                             fcwh_ref,  # [H, OUT]   bf16  fc.weight.T rows for h
                             fcwc_ref,  # [H, OUT]   bf16  fc.weight.T rows for c
                             fcb_ref,   # [1, OUT]   f32
                             out_ref):  # [B, OUT]   f32
    T = xp_ref.shape[0]
    B = xp_ref.shape[1]
    H = whh_ref.shape[0]

    # Hoist all loop-invariant loads out of the recurrence (they live in vregs).
    whh = whh_ref[...]                         # [H, 4H] bf16
    fcwh = fcwh_ref[...]                       # [H, OUT] bf16
    fcwc = fcwc_ref[...]                       # [H, OUT] bf16

    h0 = jnp.zeros((B, H), jnp.float32)
    c0 = jnp.zeros((B, H), jnp.float32)

    def step(t, carry):
        h, c = carry
        # ONE fused recurrent matmul per step: [B,H] @ [H,4H] -> [B,4H]
        # (bf16 operands, f32 accumulation = native MXU fast path).
        pre = xp_ref[t] + jnp.dot(h.astype(jnp.bfloat16), whh,
                                  preferred_element_type=jnp.float32)
        # Static lane slices (PyTorch gate order i, f, g, o); the slice work
        # sits on otherwise-idle VPU/XLU slots, not the MXU critical path.
        i_g = jax.nn.sigmoid(pre[:, 0 * H:1 * H])
        f_g = jax.nn.sigmoid(pre[:, 1 * H:2 * H])
        g_g = jnp.tanh(pre[:, 2 * H:3 * H])
        o_g = jax.nn.sigmoid(pre[:, 3 * H:4 * H])

        c_new = f_g * c + i_g * g_g
        h_new = o_g * jnp.tanh(c_new)

        # pack_padded_sequence semantics: state only advances while t < length[b].
        # Mask precomputed in the wrapper ([T,B,1] f32); arithmetic select.
        m = mask_ref[t]                        # [B, 1]
        h = h + m * (h_new - h)
        c = c + m * (c_new - c)
        return (h, c)

    # T is static and tiny -> fully unroll so the scheduler can interleave
    # MXU / EUP / VPU work across timesteps.  (Cap the unroll for large T.)
    h, c = lax.fori_loop(0, T, step, (h0, c0), unroll=True)

    # fc(cat(h, c)) without the lane-concat: split weight halves.
    logits = (jnp.dot(h.astype(jnp.bfloat16), fcwh, preferred_element_type=jnp.float32)
              + jnp.dot(c.astype(jnp.bfloat16), fcwc, preferred_element_type=jnp.float32)
              + fcb_ref[...])                  # [B, OUT] f32

    # Softmax with the divide on the EUP slot.
    z = logits - jnp.max(logits, axis=1, keepdims=True)
    e = jnp.exp(z)
    out_ref[...] = e * pl.reciprocal(jnp.sum(e, axis=1, keepdims=True), approx=True)


# ------------------------------- wrapper ------------------------------------ #
def bilstm_forward_pallas(text, lengths, params):
    """text: [B, T] int32, lengths: [B] int32 (0 < len <= T). Returns [B, OUT] f32."""
    emb = params["emb_table"][text].astype(jnp.float32)        # [B, T, E]
    B, T = text.shape
    E = emb.shape[-1]
    H = params["w_hh"].shape[1]
    OUT = params["fc_w"].shape[0]

    # Hoisted input projection: one [T*B, E] @ [E, 4H] bf16 matmul (f32 accum)
    # outside the serial recurrence (dropout p=0 -> identity on embeddings).
    x_tbe = jnp.transpose(emb, (1, 0, 2)).reshape(T * B, E)    # time-major rows
    bias = (params["b_ih"] + params["b_hh"]).astype(jnp.float32)        # [4H]
    xp = jnp.dot(x_tbe.astype(jnp.bfloat16),
                 params["w_ih"].T.astype(jnp.bfloat16),
                 preferred_element_type=jnp.float32) + bias    # [T*B, 4H] f32
    xp = xp.reshape(T, B, 4 * H)                               # lane-dense [T,B,128]

    # Fused recurrent weight: h @ whh -> [B, 4H] gates.
    whh = params["w_hh"].T.astype(jnp.bfloat16)                # [H, 4H]

    # Precomputed pack_padded_sequence mask: 1.0 while t < length[b].
    mask = (jnp.arange(T, dtype=jnp.int32)[:, None]
            < lengths.astype(jnp.int32)[None, :]).astype(jnp.float32)[:, :, None]  # [T,B,1]

    fc_w_t = params["fc_w"].T.astype(jnp.bfloat16)             # [2H, OUT]
    fcw_h = fc_w_t[:H]                                         # [H, OUT]
    fcw_c = fc_w_t[H:]                                         # [H, OUT]
    fc_b = params["fc_b"].astype(jnp.float32)[None, :]         # [1, OUT]

    return pl.pallas_call(
        bilstm_recurrence_kernel,
        out_shape=jax.ShapeDtypeStruct((B, OUT), jnp.float32),
        in_specs=[pl.BlockSpec(memory_space=pltpu.MemorySpace.VMEM)] * 6,
        out_specs=pl.BlockSpec(memory_space=pltpu.MemorySpace.VMEM),
    )(xp, mask, whh, fcw_h, fcw_c, fc_b)


# -------------------------- pure-JAX references ------------------------------ #
def _bilstm_forward_ref(text, lengths, params, *, bf16_matmuls):
    """Reference. bf16_matmuls=True mirrors the kernel's bf16-operand / f32-accum
    matmul precision; False is the full-f32 (HIGHEST precision) baseline."""
    emb = params["emb_table"][text].astype(jnp.float32)        # [B, T, E]
    B, T, _ = emb.shape
    H = params["w_hh"].shape[1]
    bias = params["b_ih"] + params["b_hh"]

    if bf16_matmuls:
        cast = lambda a: a.astype(jnp.bfloat16)
        dot = lambda a, b: jnp.dot(cast(a), cast(b), preferred_element_type=jnp.float32)
    else:
        dot = lambda a, b: jnp.dot(a, b, precision=lax.Precision.HIGHEST,
                                   preferred_element_type=jnp.float32)

    w_ih_t = params["w_ih"].T
    w_hh_t = params["w_hh"].T
    h = jnp.zeros((B, H), jnp.float32)
    c = jnp.zeros((B, H), jnp.float32)

    def step(t, hc):
        h, c = hc
        x_t = emb[:, t, :]
        gates = dot(x_t, w_ih_t) + dot(h, w_hh_t) + bias
        i_g = jax.nn.sigmoid(gates[:, :H])
        f_g = jax.nn.sigmoid(gates[:, H:2 * H])
        g_g = jnp.tanh(gates[:, 2 * H:3 * H])
        o_g = jax.nn.sigmoid(gates[:, 3 * H:])
        c_new = f_g * c + i_g * g_g
        h_new = o_g * jnp.tanh(c_new)
        m = (lengths > t)[:, None]
        return jnp.where(m, h_new, h), jnp.where(m, c_new, c)

    h, c = lax.fori_loop(0, T, step, (h, c))
    hc = jnp.concatenate([h, c], axis=1)
    logits = dot(hc, params["fc_w"].T) + params["fc_b"]
    return jax.nn.softmax(logits, axis=1)


# --------------------------------- main ------------------------------------- #
if __name__ == "__main__":
    # Module hyper-parameters (small, consistent with BiLSTM.__init__)
    VOCAB, EMB, HIDDEN, OUT, N_LAYERS = 50, 32, 32, 4, 2
    B, T = 4, 8

    key = jax.random.PRNGKey(0)
    ks = jax.random.split(key, 8)
    bound = 1.0 / jnp.sqrt(HIDDEN)
    params = {
        "emb_table": jax.random.normal(ks[0], (VOCAB, EMB), jnp.float32),
        # layer-0 forward-direction LSTM weights (only ones reaching the output)
        "w_ih": jax.random.uniform(ks[1], (4 * HIDDEN, EMB), jnp.float32, -bound, bound),
        "w_hh": jax.random.uniform(ks[2], (4 * HIDDEN, HIDDEN), jnp.float32, -bound, bound),
        "b_ih": jax.random.uniform(ks[3], (4 * HIDDEN,), jnp.float32, -bound, bound),
        "b_hh": jax.random.uniform(ks[4], (4 * HIDDEN,), jnp.float32, -bound, bound),
        "fc_w": jax.random.uniform(ks[5], (OUT, 2 * HIDDEN), jnp.float32,
                                   -1.0 / jnp.sqrt(2 * HIDDEN), 1.0 / jnp.sqrt(2 * HIDDEN)),
        "fc_b": jax.random.uniform(ks[6], (OUT,), jnp.float32,
                                   -1.0 / jnp.sqrt(2 * HIDDEN), 1.0 / jnp.sqrt(2 * HIDDEN)),
    }
    # TODO(synk): backward-direction and layers >0 of the bidirectional LSTM are
    # dead code w.r.t. the module's returned output (dense_outputs[0]) and are omitted.

    text = jax.random.randint(ks[7], (B, T), 0, VOCAB, dtype=jnp.int32)
    # lengths must satisfy 0 < len <= T (pack_padded_sequence, enforce_sorted).
    lengths = jnp.array([8, 6, 5, 3], dtype=jnp.int32)

    out = jax.block_until_ready(bilstm_forward_pallas(text, lengths, params))

    # Tight check vs. a reference at matching (bf16-operand) matmul precision.
    ref_match = jax.block_until_ready(
        _bilstm_forward_ref(text, lengths, params, bf16_matmuls=True))
    # Loose check vs. the full-f32 reference (guards overall semantics).
    ref_f32 = jax.block_until_ready(
        _bilstm_forward_ref(text, lengths, params, bf16_matmuls=False))

    assert out.shape == (B, OUT)
    assert jnp.allclose(out, ref_match, atol=5e-3, rtol=5e-3)
    assert jnp.allclose(out, ref_f32, atol=2.5e-2, rtol=2.5e-2)
    assert jnp.allclose(jnp.sum(out, axis=1), 1.0, atol=5e-3)
    print("KERNEL_OK")
</pallas_src>

<mosaic_0001>
module attributes {stable_mosaic.version = 11 : i64} {
  func.func @bilstm_recurrence_kernel(%arg0: memref<8x4x128xf32, #tpu.memory_space<vmem>>, %arg1: memref<8x4x1xf32, #tpu.memory_space<vmem>>, %arg2: memref<32x128xbf16, #tpu.memory_space<vmem>>, %arg3: memref<32x4xbf16, #tpu.memory_space<vmem>>, %arg4: memref<32x4xbf16, #tpu.memory_space<vmem>>, %arg5: memref<1x4xf32, #tpu.memory_space<vmem>>, %arg6: memref<4x4xf32, #tpu.memory_space<vmem>>) attributes {dimension_semantics = [], scalar_prefetch = 0 : i64, scratch_operands = 0 : i64, tpu.core_type = #tpu.core_type<tc>} {
    %c0 = arith.constant 0 : index
    %c0_0 = arith.constant 0 : index
    %0 = vector.load %arg2[%c0, %c0_0] : memref<32x128xbf16, #tpu.memory_space<vmem>>, vector<32x128xbf16>
    %c0_1 = arith.constant 0 : index
    %c0_2 = arith.constant 0 : index
    %1 = vector.load %arg3[%c0_1, %c0_2] : memref<32x4xbf16, #tpu.memory_space<vmem>>, vector<32x4xbf16>
    %c0_3 = arith.constant 0 : index
    %c0_4 = arith.constant 0 : index
    %2 = vector.load %arg4[%c0_3, %c0_4] : memref<32x4xbf16, #tpu.memory_space<vmem>>, vector<32x4xbf16>
    %cst = arith.constant 0.000000e+00 : f32
    %3 = vector.broadcast %cst : f32 to vector<4x32xf32>
    %cst_5 = arith.constant 0.000000e+00 : f32
    %4 = vector.broadcast %cst_5 : f32 to vector<4x32xf32>
    %c0_i32 = arith.constant 0 : i32
    %5 = arith.index_cast %c0_i32 : i32 to index
    %c0_6 = arith.constant 0 : index
    %c0_7 = arith.constant 0 : index
    %6 = vector.load %arg0[%5, %c0_6, %c0_7] : memref<8x4x128xf32, #tpu.memory_space<vmem>>, vector<1x4x128xf32>
    %7 = vector.shape_cast %6 : vector<1x4x128xf32> to vector<4x128xf32>
    %8 = arith.truncf %3 : vector<4x32xf32> to vector<4x32xbf16>
    %cst_8 = arith.constant dense<0.000000e+00> : vector<4x128xf32>
    %9 = tpu.matmul %8, %0, %cst_8 {dimension_numbers = #tpu.dot_dimension_numbers<[1], [0], [0], [1], [0, 0, 1, 1], [], []>} : vector<4x32xbf16>, vector<32x128xbf16>, vector<4x128xf32> -> vector<4x128xf32>
    %10 = arith.addf %7, %9 : vector<4x128xf32>
    %11 = vector.extract_strided_slice %10 {offsets = [0, 0], sizes = [4, 32], strides = [1, 1]} : vector<4x128xf32> to vector<4x32xf32>
    %12 = arith.negf %11 : vector<4x32xf32>
    %13 = math.exp %12 : vector<4x32xf32>
    %cst_9 = arith.constant 1.000000e+00 : f32
    %14 = vector.broadcast %cst_9 : f32 to vector<4x32xf32>
    %15 = arith.addf %14, %13 : vector<4x32xf32>
    %16 = arith.divf %14, %15 : vector<4x32xf32>
    %17 = vector.extract_strided_slice %10 {offsets = [0, 32], sizes = [4, 32], strides = [1, 1]} : vector<4x128xf32> to vector<4x32xf32>
    %18 = arith.negf %17 : vector<4x32xf32>
    %19 = math.exp %18 : vector<4x32xf32>
    %cst_10 = arith.constant 1.000000e+00 : f32
    %20 = vector.broadcast %cst_10 : f32 to vector<4x32xf32>
    %21 = arith.addf %20, %19 : vector<4x32xf32>
    %22 = arith.divf %20, %21 : vector<4x32xf32>
    %23 = vector.extract_strided_slice %10 {offsets = [0, 64], sizes = [4, 32], strides = [1, 1]} : vector<4x128xf32> to vector<4x32xf32>
    %24 = math.tanh %23 : vector<4x32xf32>
    %25 = vector.extract_strided_slice %10 {offsets = [0, 96], sizes = [4, 32], strides = [1, 1]} : vector<4x128xf32> to vector<4x32xf32>
    %26 = arith.negf %25 : vector<4x32xf32>
    %27 = math.exp %26 : vector<4x32xf32>
    %cst_11 = arith.constant 1.000000e+00 : f32
    %28 = vector.broadcast %cst_11 : f32 to vector<4x32xf32>
    %29 = arith.addf %28, %27 : vector<4x32xf32>
    %30 = arith.divf %28, %29 : vector<4x32xf32>
    %31 = arith.mulf %22, %4 : vector<4x32xf32>
    %32 = arith.mulf %16, %24 : vector<4x32xf32>
    %33 = arith.addf %31, %32 : vector<4x32xf32>
    %34 = math.tanh %33 : vector<4x32xf32>
    %35 = arith.mulf %30, %34 : vector<4x32xf32>
    %36 = arith.index_cast %c0_i32 : i32 to index
    %c0_12 = arith.constant 0 : index
    %c0_13 = arith.constant 0 : index
    %37 = vector.load %arg1[%36, %c0_12, %c0_13] : memref<8x4x1xf32, #tpu.memory_space<vmem>>, vector<1x4x1xf32>
    %38 = vector.shape_cast %37 : vector<1x4x1xf32> to vector<4x1xf32>
    %39 = arith.subf %35, %3 : vector<4x32xf32>
    %40 = vector.broadcast %38 : vector<4x1xf32> to vector<4x32xf32>
    %41 = arith.mulf %40, %39 : vector<4x32xf32>
    %42 = arith.addf %3, %41 : vector<4x32xf32>
    %43 = arith.subf %33, %4 : vector<4x32xf32>
    %44 = vector.broadcast %38 : vector<4x1xf32> to vector<4x32xf32>
    %45 = arith.mulf %44, %43 : vector<4x32xf32>
    %46 = arith.addf %4, %45 : vector<4x32xf32>
    %c1_i32 = arith.constant 1 : i32
    %47 = arith.index_cast %c1_i32 : i32 to index
    %c0_14 = arith.constant 0 : index
    %c0_15 = arith.constant 0 : index
    %48 = vector.load %arg0[%47, %c0_14, %c0_15] : memref<8x4x128xf32, #tpu.memory_space<vmem>>, vector<1x4x128xf32>
    %49 = vector.shape_cast %48 : vector<1x4x128xf32> to vector<4x128xf32>
    %50 = arith.truncf %42 : vector<4x32xf32> to vector<4x32xbf16>
    %cst_16 = arith.constant dense<0.000000e+00> : vector<4x128xf32>
    %51 = tpu.matmul %50, %0, %cst_16 {dimension_numbers = #tpu.dot_dimension_numbers<[1], [0], [0], [1], [0, 0, 1, 1], [], []>} : vector<4x32xbf16>, vector<32x128xbf16>, vector<4x128xf32> -> vector<4x128xf32>
    %52 = arith.addf %49, %51 : vector<4x128xf32>
    %53 = vector.extract_strided_slice %52 {offsets = [0, 0], sizes = [4, 32], strides = [1, 1]} : vector<4x128xf32> to vector<4x32xf32>
    %54 = arith.negf %53 : vector<4x32xf32>
    %55 = math.exp %54 : vector<4x32xf32>
    %cst_17 = arith.constant 1.000000e+00 : f32
    %56 = vector.broadcast %cst_17 : f32 to vector<4x32xf32>
    %57 = arith.addf %56, %55 : vector<4x32xf32>
    %58 = arith.divf %56, %57 : vector<4x32xf32>
    %59 = vector.extract_strided_slice %52 {offsets = [0, 32], sizes = [4, 32], strides = [1, 1]} : vector<4x128xf32> to vector<4x32xf32>
    %60 = arith.negf %59 : vector<4x32xf32>
    %61 = math.exp %60 : vector<4x32xf32>
    %cst_18 = arith.constant 1.000000e+00 : f32
    %62 = vector.broadcast %cst_18 : f32 to vector<4x32xf32>
    %63 = arith.addf %62, %61 : vector<4x32xf32>
    %64 = arith.divf %62, %63 : vector<4x32xf32>
    %65 = vector.extract_strided_slice %52 {offsets = [0, 64], sizes = [4, 32], strides = [1, 1]} : vector<4x128xf32> to vector<4x32xf32>
    %66 = math.tanh %65 : vector<4x32xf32>
    %67 = vector.extract_strided_slice %52 {offsets = [0, 96], sizes = [4, 32], strides = [1, 1]} : vector<4x128xf32> to vector<4x32xf32>
    %68 = arith.negf %67 : vector<4x32xf32>
    %69 = math.exp %68 : vector<4x32xf32>
    %cst_19 = arith.constant 1.000000e+00 : f32
    %70 = vector.broadcast %cst_19 : f32 to vector<4x32xf32>
    %71 = arith.addf %70, %69 : vector<4x32xf32>
    %72 = arith.divf %70, %71 : vector<4x32xf32>
    %73 = arith.mulf %64, %46 : vector<4x32xf32>
    %74 = arith.mulf %58, %66 : vector<4x32xf32>
    %75 = arith.addf %73, %74 : vector<4x32xf32>
    %76 = math.tanh %75 : vector<4x32xf32>
    %77 = arith.mulf %72, %76 : vector<4x32xf32>
    %78 = arith.index_cast %c1_i32 : i32 to index
    %c0_20 = arith.constant 0 : index
    %c0_21 = arith.constant 0 : index
    %79 = vector.load %arg1[%78, %c0_20, %c0_21] : memref<8x4x1xf32, #tpu.memory_space<vmem>>, vector<1x4x1xf32>
    %80 = vector.shape_cast %79 : vector<1x4x1xf32> to vector<4x1xf32>
    %81 = arith.subf %77, %42 : vector<4x32xf32>
    %82 = vector.broadcast %80 : vector<4x1xf32> to vector<4x32xf32>
    %83 = arith.mulf %82, %81 : vector<4x32xf32>
    %84 = arith.addf %42, %83 : vector<4x32xf32>
    %85 = arith.subf %75, %46 : vector<4x32xf32>
    %86 = vector.broadcast %80 : vector<4x1xf32> to vector<4x32xf32>
    %87 = arith.mulf %86, %85 : vector<4x32xf32>
    %88 = arith.addf %46, %87 : vector<4x32xf32>
    %c2_i32 = arith.constant 2 : i32
    %89 = arith.index_cast %c2_i32 : i32 to index
    %c0_22 = arith.constant 0 : index
    %c0_23 = arith.constant 0 : index
    %90 = vector.load %arg0[%89, %c0_22, %c0_23] : memref<8x4x128xf32, #tpu.memory_space<vmem>>, vector<1x4x128xf32>
    %91 = vector.shape_cast %90 : vector<1x4x128xf32> to vector<4x128xf32>
    %92 = arith.truncf %84 : vector<4x32xf32> to vector<4x32xbf16>
    %cst_24 = arith.constant dense<0.000000e+00> : vector<4x128xf32>
    %93 = tpu.matmul %92, %0, %cst_24 {dimension_numbers = #tpu.dot_dimension_numbers<[1], [0], [0], [1], [0, 0, 1, 1], [], []>} : vector<4x32xbf16>, vector<32x128xbf16>, vector<4x128xf32> -> vector<4x128xf32>
    %94 = arith.addf %91, %93 : vector<4x128xf32>
    %95 = vector.extract_strided_slice %94 {offsets = [0, 0], sizes = [4, 32], strides = [1, 1]} : vector<4x128xf32> to vector<4x32xf32>
    %96 = arith.negf %95 : vector<4x32xf32>
    %97 = math.exp %96 : vector<4x32xf32>
    %cst_25 = arith.constant 1.000000e+00 : f32
    %98 = vector.broadcast %cst_25 : f32 to vector<4x32xf32>
    %99 = arith.addf %98, %97 : vector<4x32xf32>
    %100 = arith.divf %98, %99 : vector<4x32xf32>
    %101 = vector.extract_strided_slice %94 {offsets = [0, 32], sizes = [4, 32], strides = [1, 1]} : vector<4x128xf32> to vector<4x32xf32>
    %102 = arith.negf %101 : vector<4x32xf32>
    %103 = math.exp %102 : vector<4x32xf32>
    %cst_26 = arith.constant 1.000000e+00 : f32
    %104 = vector.broadcast %cst_26 : f32 to vector<4x32xf32>
    %105 = arith.addf %104, %103 : vector<4x32xf32>
    %106 = arith.divf %104, %105 : vector<4x32xf32>
    %107 = vector.extract_strided_slice %94 {offsets = [0, 64], sizes = [4, 32], strides = [1, 1]} : vector<4x128xf32> to vector<4x32xf32>
    %108 = math.tanh %107 : vector<4x32xf32>
    %109 = vector.extract_strided_slice %94 {offsets = [0, 96], sizes = [4, 32], strides = [1, 1]} : vector<4x128xf32> to vector<4x32xf32>
    %110 = arith.negf %109 : vector<4x32xf32>
    %111 = math.exp %110 : vector<4x32xf32>
    %cst_27 = arith.constant 1.000000e+00 : f32
    %112 = vector.broadcast %cst_27 : f32 to vector<4x32xf32>
    %113 = arith.addf %112, %111 : vector<4x32xf32>
    %114 = arith.divf %112, %113 : vector<4x32xf32>
    %115 = arith.mulf %106, %88 : vector<4x32xf32>
    %116 = arith.mulf %100, %108 : vector<4x32xf32>
    %117 = arith.addf %115, %116 : vector<4x32xf32>
    %118 = math.tanh %117 : vector<4x32xf32>
    %119 = arith.mulf %114, %118 : vector<4x32xf32>
    %120 = arith.index_cast %c2_i32 : i32 to index
    %c0_28 = arith.constant 0 : index
    %c0_29 = arith.constant 0 : index
    %121 = vector.load %arg1[%120, %c0_28, %c0_29] : memref<8x4x1xf32, #tpu.memory_space<vmem>>, vector<1x4x1xf32>
    %122 = vector.shape_cast %121 : vector<1x4x1xf32> to vector<4x1xf32>
    %123 = arith.subf %119, %84 : vector<4x32xf32>
    %124 = vector.broadcast %122 : vector<4x1xf32> to vector<4x32xf32>
    %125 = arith.mulf %124, %123 : vector<4x32xf32>
    %126 = arith.addf %84, %125 : vector<4x32xf32>
    %127 = arith.subf %117, %88 : vector<4x32xf32>
    %128 = vector.broadcast %122 : vector<4x1xf32> to vector<4x32xf32>
    %129 = arith.mulf %128, %127 : vector<4x32xf32>
    %130 = arith.addf %88, %129 : vector<4x32xf32>
    %c3_i32 = arith.constant 3 : i32
    %131 = arith.index_cast %c3_i32 : i32 to index
    %c0_30 = arith.constant 0 : index
    %c0_31 = arith.constant 0 : index
    %132 = vector.load %arg0[%131, %c0_30, %c0_31] : memref<8x4x128xf32, #tpu.memory_space<vmem>>, vector<1x4x128xf32>
    %133 = vector.shape_cast %132 : vector<1x4x128xf32> to vector<4x128xf32>
    %134 = arith.truncf %126 : vector<4x32xf32> to vector<4x32xbf16>
    %cst_32 = arith.constant dense<0.000000e+00> : vector<4x128xf32>
    %135 = tpu.matmul %134, %0, %cst_32 {dimension_numbers = #tpu.dot_dimension_numbers<[1], [0], [0], [1], [0, 0, 1, 1], [], []>} : vector<4x32xbf16>, vector<32x128xbf16>, vector<4x128xf32> -> vector<4x128xf32>
    %136 = arith.addf %133, %135 : vector<4x128xf32>
    %137 = vector.extract_strided_slice %136 {offsets = [0, 0], sizes = [4, 32], strides = [1, 1]} : vector<4x128xf32> to vector<4x32xf32>
    %138 = arith.negf %137 : vector<4x32xf32>
    %139 = math.exp %138 : vector<4x32xf32>
    %cst_33 = arith.constant 1.000000e+00 : f32
    %140 = vector.broadcast %cst_33 : f32 to vector<4x32xf32>
    %141 = arith.addf %140, %139 : vector<4x32xf32>
    %142 = arith.divf %140, %141 : vector<4x32xf32>
    %143 = vector.extract_strided_slice %136 {offsets = [0, 32], sizes = [4, 32], strides = [1, 1]} : vector<4x128xf32> to vector<4x32xf32>
    %144 = arith.negf %143 : vector<4x32xf32>
    %145 = math.exp %144 : vector<4x32xf32>
    %cst_34 = arith.constant 1.000000e+00 : f32
    %146 = vector.broadcast %cst_34 : f32 to vector<4x32xf32>
    %147 = arith.addf %146, %145 : vector<4x32xf32>
    %148 = arith.divf %146, %147 : vector<4x32xf32>
    %149 = vector.extract_strided_slice %136 {offsets = [0, 64], sizes = [4, 32], strides = [1, 1]} : vector<4x128xf32> to vector<4x32xf32>
    %150 = math.tanh %149 : vector<4x32xf32>
    %151 = vector.extract_strided_slice %136 {offsets = [0, 96], sizes = [4, 32], strides = [1, 1]} : vector<4x128xf32> to vector<4x32xf32>
    %152 = arith.negf %151 : vector<4x32xf32>
    %153 = math.exp %152 : vector<4x32xf32>
    %cst_35 = arith.constant 1.000000e+00 : f32
    %154 = vector.broadcast %cst_35 : f32 to vector<4x32xf32>
    %155 = arith.addf %154, %153 : vector<4x32xf32>
    %156 = arith.divf %154, %155 : vector<4x32xf32>
    %157 = arith.mulf %148, %130 : vector<4x32xf32>
    %158 = arith.mulf %142, %150 : vector<4x32xf32>
    %159 = arith.addf %157, %158 : vector<4x32xf32>
    %160 = math.tanh %159 : vector<4x32xf32>
    %161 = arith.mulf %156, %160 : vector<4x32xf32>
    %162 = arith.index_cast %c3_i32 : i32 to index
    %c0_36 = arith.constant 0 : index
    %c0_37 = arith.constant 0 : index
    %163 = vector.load %arg1[%162, %c0_36, %c0_37] : memref<8x4x1xf32, #tpu.memory_space<vmem>>, vector<1x4x1xf32>
    %164 = vector.shape_cast %163 : vector<1x4x1xf32> to vector<4x1xf32>
    %165 = arith.subf %161, %126 : vector<4x32xf32>
    %166 = vector.broadcast %164 : vector<4x1xf32> to vector<4x32xf32>
    %167 = arith.mulf %166, %165 : vector<4x32xf32>
    %168 = arith.addf %126, %167 : vector<4x32xf32>
    %169 = arith.subf %159, %130 : vector<4x32xf32>
    %170 = vector.broadcast %164 : vector<4x1xf32> to vector<4x32xf32>
    %171 = arith.mulf %170, %169 : vector<4x32xf32>
    %172 = arith.addf %130, %171 : vector<4x32xf32>
    %c4_i32 = arith.constant 4 : i32
    %173 = arith.index_cast %c4_i32 : i32 to index
    %c0_38 = arith.constant 0 : index
    %c0_39 = arith.constant 0 : index
    %174 = vector.load %arg0[%173, %c0_38, %c0_39] : memref<8x4x128xf32, #tpu.memory_space<vmem>>, vector<1x4x128xf32>
    %175 = vector.shape_cast %174 : vector<1x4x128xf32> to vector<4x128xf32>
    %176 = arith.truncf %168 : vector<4x32xf32> to vector<4x32xbf16>
    %cst_40 = arith.constant dense<0.000000e+00> : vector<4x128xf32>
    %177 = tpu.matmul %176, %0, %cst_40 {dimension_numbers = #tpu.dot_dimension_numbers<[1], [0], [0], [1], [0, 0, 1, 1], [], []>} : vector<4x32xbf16>, vector<32x128xbf16>, vector<4x128xf32> -> vector<4x128xf32>
    %178 = arith.addf %175, %177 : vector<4x128xf32>
    %179 = vector.extract_strided_slice %178 {offsets = [0, 0], sizes = [4, 32], strides = [1, 1]} : vector<4x128xf32> to vector<4x32xf32>
    %180 = arith.negf %179 : vector<4x32xf32>
    %181 = math.exp %180 : vector<4x32xf32>
    %cst_41 = arith.constant 1.000000e+00 : f32
    %182 = vector.broadcast %cst_41 : f32 to vector<4x32xf32>
    %183 = arith.addf %182, %181 : vector<4x32xf32>
    %184 = arith.divf %182, %183 : vector<4x32xf32>
    %185 = vector.extract_strided_slice %178 {offsets = [0, 32], sizes = [4, 32], strides = [1, 1]} : vector<4x128xf32> to vector<4x32xf32>
    %186 = arith.negf %185 : vector<4x32xf32>
    %187 = math.exp %186 : vector<4x32xf32>
    %cst_42 = arith.constant 1.000000e+00 : f32
    %188 = vector.broadcast %cst_42 : f32 to vector<4x32xf32>
    %189 = arith.addf %188, %187 : vector<4x32xf32>
    %190 = arith.divf %188, %189 : vector<4x32xf32>
    %191 = vector.extract_strided_slice %178 {offsets = [0, 64], sizes = [4, 32], strides = [1, 1]} : vector<4x128xf32> to vector<4x32xf32>
    %192 = math.tanh %191 : vector<4x32xf32>
    %193 = vector.extract_strided_slice %178 {offsets = [0, 96], sizes = [4, 32], strides = [1, 1]} : vector<4x128xf32> to vector<4x32xf32>
    %194 = arith.negf %193 : vector<4x32xf32>
    %195 = math.exp %194 : vector<4x32xf32>
    %cst_43 = arith.constant 1.000000e+00 : f32
    %196 = vector.broadcast %cst_43 : f32 to vector<4x32xf32>
    %197 = arith.addf %196, %195 : vector<4x32xf32>
    %198 = arith.divf %196, %197 : vector<4x32xf32>
    %199 = arith.mulf %190, %172 : vector<4x32xf32>
    %200 = arith.mulf %184, %192 : vector<4x32xf32>
    %201 = arith.addf %199, %200 : vector<4x32xf32>
    %202 = math.tanh %201 : vector<4x32xf32>
    %203 = arith.mulf %198, %202 : vector<4x32xf32>
    %204 = arith.index_cast %c4_i32 : i32 to index
    %c0_44 = arith.constant 0 : index
    %c0_45 = arith.constant 0 : index
    %205 = vector.load %arg1[%204, %c0_44, %c0_45] : memref<8x4x1xf32, #tpu.memory_space<vmem>>, vector<1x4x1xf32>
    %206 = vector.shape_cast %205 : vector<1x4x1xf32> to vector<4x1xf32>
    %207 = arith.subf %203, %168 : vector<4x32xf32>
    %208 = vector.broadcast %206 : vector<4x1xf32> to vector<4x32xf32>
    %209 = arith.mulf %208, %207 : vector<4x32xf32>
    %210 = arith.addf %168, %209 : vector<4x32xf32>
    %211 = arith.subf %201, %172 : vector<4x32xf32>
    %212 = vector.broadcast %206 : vector<4x1xf32> to vector<4x32xf32>
    %213 = arith.mulf %212, %211 : vector<4x32xf32>
    %214 = arith.addf %172, %213 : vector<4x32xf32>
    %c5_i32 = arith.constant 5 : i32
    %215 = arith.index_cast %c5_i32 : i32 to index
    %c0_46 = arith.constant 0 : index
    %c0_47 = arith.constant 0 : index
    %216 = vector.load %arg0[%215, %c0_46, %c0_47] : memref<8x4x128xf32, #tpu.memory_space<vmem>>, vector<1x4x128xf32>
    %217 = vector.shape_cast %216 : vector<1x4x128xf32> to vector<4x128xf32>
    %218 = arith.truncf %210 : vector<4x32xf32> to vector<4x32xbf16>
    %cst_48 = arith.constant dense<0.000000e+00> : vector<4x128xf32>
    %219 = tpu.matmul %218, %0, %cst_48 {dimension_numbers = #tpu.dot_dimension_numbers<[1], [0], [0], [1], [0, 0, 1, 1], [], []>} : vector<4x32xbf16>, vector<32x128xbf16>, vector<4x128xf32> -> vector<4x128xf32>
    %220 = arith.addf %217, %219 : vector<4x128xf32>
    %221 = vector.extract_strided_slice %220 {offsets = [0, 0], sizes = [4, 32], strides = [1, 1]} : vector<4x128xf32> to vector<4x32xf32>
    %222 = arith.negf %221 : vector<4x32xf32>
    %223 = math.exp %222 : vector<4x32xf32>
    %cst_49 = arith.constant 1.000000e+00 : f32
    %224 = vector.broadcast %cst_49 : f32 to vector<4x32xf32>
    %225 = arith.addf %224, %223 : vector<4x32xf32>
    %226 = arith.divf %224, %225 : vector<4x32xf32>
    %227 = vector.extract_strided_slice %220 {offsets = [0, 32], sizes = [4, 32], strides = [1, 1]} : vector<4x128xf32> to vector<4x32xf32>
    %228 = arith.negf %227 : vector<4x32xf32>
    %229 = math.exp %228 : vector<4x32xf32>
    %cst_50 = arith.constant 1.000000e+00 : f32
    %230 = vector.broadcast %cst_50 : f32 to vector<4x32xf32>
    %231 = arith.addf %230, %229 : vector<4x32xf32>
    %232 = arith.divf %230, %231 : vector<4x32xf32>
    %233 = vector.extract_strided_slice %220 {offsets = [0, 64], sizes = [4, 32], strides = [1, 1]} : vector<4x128xf32> to vector<4x32xf32>
    %234 = math.tanh %233 : vector<4x32xf32>
    %235 = vector.extract_strided_slice %220 {offsets = [0, 96], sizes = [4, 32], strides = [1, 1]} : vector<4x128xf32> to vector<4x32xf32>
    %236 = arith.negf %235 : vector<4x32xf32>
    %237 = math.exp %236 : vector<4x32xf32>
    %cst_51 = arith.constant 1.000000e+00 : f32
    %238 = vector.broadcast %cst_51 : f32 to vector<4x32xf32>
    %239 = arith.addf %238, %237 : vector<4x32xf32>
    %240 = arith.divf %238, %239 : vector<4x32xf32>
    %241 = arith.mulf %232, %214 : vector<4x32xf32>
    %242 = arith.mulf %226, %234 : vector<4x32xf32>
    %243 = arith.addf %241, %242 : vector<4x32xf32>
    %244 = math.tanh %243 : vector<4x32xf32>
    %245 = arith.mulf %240, %244 : vector<4x32xf32>
    %246 = arith.index_cast %c5_i32 : i32 to index
    %c0_52 = arith.constant 0 : index
    %c0_53 = arith.constant 0 : index
    %247 = vector.load %arg1[%246, %c0_52, %c0_53] : memref<8x4x1xf32, #tpu.memory_space<vmem>>, vector<1x4x1xf32>
    %248 = vector.shape_cast %247 : vector<1x4x1xf32> to vector<4x1xf32>
    %249 = arith.subf %245, %210 : vector<4x32xf32>
    %250 = vector.broadcast %248 : vector<4x1xf32> to vector<4x32xf32>
    %251 = arith.mulf %250, %249 : vector<4x32xf32>
    %252 = arith.addf %210, %251 : vector<4x32xf32>
    %253 = arith.subf %243, %214 : vector<4x32xf32>
    %254 = vector.broadcast %248 : vector<4x1xf32> to vector<4x32xf32>
    %255 = arith.mulf %254, %253 : vector<4x32xf32>
    %256 = arith.addf %214, %255 : vector<4x32xf32>
    %c6_i32 = arith.constant 6 : i32
    %257 = arith.index_cast %c6_i32 : i32 to index
    %c0_54 = arith.constant 0 : index
    %c0_55 = arith.constant 0 : index
    %258 = vector.load %arg0[%257, %c0_54, %c0_55] : memref<8x4x128xf32, #tpu.memory_space<vmem>>, vector<1x4x128xf32>
    %259 = vector.shape_cast %258 : vector<1x4x128xf32> to vector<4x128xf32>
    %260 = arith.truncf %252 : vector<4x32xf32> to vector<4x32xbf16>
    %cst_56 = arith.constant dense<0.000000e+00> : vector<4x128xf32>
    %261 = tpu.matmul %260, %0, %cst_56 {dimension_numbers = #tpu.dot_dimension_numbers<[1], [0], [0], [1], [0, 0, 1, 1], [], []>} : vector<4x32xbf16>, vector<32x128xbf16>, vector<4x128xf32> -> vector<4x128xf32>
    %262 = arith.addf %259, %261 : vector<4x128xf32>
    %263 = vector.extract_strided_slice %262 {offsets = [0, 0], sizes = [4, 32], strides = [1, 1]} : vector<4x128xf32> to vector<4x32xf32>
    %264 = arith.negf %263 : vector<4x32xf32>
    %265 = math.exp %264 : vector<4x32xf32>
    %cst_57 = arith.constant 1.000000e+00 : f32
    %266 = vector.broadcast %cst_57 : f32 to vector<4x32xf32>
    %267 = arith.addf %266, %265 : vector<4x32xf32>
    %268 = arith.divf %266, %267 : vector<4x32xf32>
    %269 = vector.extract_strided_slice %262 {offsets = [0, 32], sizes = [4, 32], strides = [1, 1]} : vector<4x128xf32> to vector<4x32xf32>
    %270 = arith.negf %269 : vector<4x32xf32>
    %271 = math.exp %270 : vector<4x32xf32>
    %cst_58 = arith.constant 1.000000e+00 : f32
    %272 = vector.broadcast %cst_58 : f32 to vector<4x32xf32>
    %273 = arith.addf %272, %271 : vector<4x32xf32>
    %274 = arith.divf %272, %273 : vector<4x32xf32>
    %275 = vector.extract_strided_slice %262 {offsets = [0, 64], sizes = [4, 32], strides = [1, 1]} : vector<4x128xf32> to vector<4x32xf32>
    %276 = math.tanh %275 : vector<4x32xf32>
    %277 = vector.extract_strided_slice %262 {offsets = [0, 96], sizes = [4, 32], strides = [1, 1]} : vector<4x128xf32> to vector<4x32xf32>
    %278 = arith.negf %277 : vector<4x32xf32>
    %279 = math.exp %278 : vector<4x32xf32>
    %cst_59 = arith.constant 1.000000e+00 : f32
    %280 = vector.broadcast %cst_59 : f32 to vector<4x32xf32>
    %281 = arith.addf %280, %279 : vector<4x32xf32>
    %282 = arith.divf %280, %281 : vector<4x32xf32>
    %283 = arith.mulf %274, %256 : vector<4x32xf32>
    %284 = arith.mulf %268, %276 : vector<4x32xf32>
    %285 = arith.addf %283, %284 : vector<4x32xf32>
    %286 = math.tanh %285 : vector<4x32xf32>
    %287 = arith.mulf %282, %286 : vector<4x32xf32>
    %288 = arith.index_cast %c6_i32 : i32 to index
    %c0_60 = arith.constant 0 : index
    %c0_61 = arith.constant 0 : index
    %289 = vector.load %arg1[%288, %c0_60, %c0_61] : memref<8x4x1xf32, #tpu.memory_space<vmem>>, vector<1x4x1xf32>
    %290 = vector.shape_cast %289 : vector<1x4x1xf32> to vector<4x1xf32>
    %291 = arith.subf %287, %252 : vector<4x32xf32>
    %292 = vector.broadcast %290 : vector<4x1xf32> to vector<4x32xf32>
    %293 = arith.mulf %292, %291 : vector<4x32xf32>
    %294 = arith.addf %252, %293 : vector<4x32xf32>
    %295 = arith.subf %285, %256 : vector<4x32xf32>
    %296 = vector.broadcast %290 : vector<4x1xf32> to vector<4x32xf32>
    %297 = arith.mulf %296, %295 : vector<4x32xf32>
    %298 = arith.addf %256, %297 : vector<4x32xf32>
    %c7_i32 = arith.constant 7 : i32
    %299 = arith.index_cast %c7_i32 : i32 to index
    %c0_62 = arith.constant 0 : index
    %c0_63 = arith.constant 0 : index
    %300 = vector.load %arg0[%299, %c0_62, %c0_63] : memref<8x4x128xf32, #tpu.memory_space<vmem>>, vector<1x4x128xf32>
    %301 = vector.shape_cast %300 : vector<1x4x128xf32> to vector<4x128xf32>
    %302 = arith.truncf %294 : vector<4x32xf32> to vector<4x32xbf16>
    %cst_64 = arith.constant dense<0.000000e+00> : vector<4x128xf32>
    %303 = tpu.matmul %302, %0, %cst_64 {dimension_numbers = #tpu.dot_dimension_numbers<[1], [0], [0], [1], [0, 0, 1, 1], [], []>} : vector<4x32xbf16>, vector<32x128xbf16>, vector<4x128xf32> -> vector<4x128xf32>
    %304 = arith.addf %301, %303 : vector<4x128xf32>
    %305 = vector.extract_strided_slice %304 {offsets = [0, 0], sizes = [4, 32], strides = [1, 1]} : vector<4x128xf32> to vector<4x32xf32>
    %306 = arith.negf %305 : vector<4x32xf32>
    %307 = math.exp %306 : vector<4x32xf32>
    %cst_65 = arith.constant 1.000000e+00 : f32
    %308 = vector.broadcast %cst_65 : f32 to vector<4x32xf32>
    %309 = arith.addf %308, %307 : vector<4x32xf32>
    %310 = arith.divf %308, %309 : vector<4x32xf32>
    %311 = vector.extract_strided_slice %304 {offsets = [0, 32], sizes = [4, 32], strides = [1, 1]} : vector<4x128xf32> to vector<4x32xf32>
    %312 = arith.negf %311 : vector<4x32xf32>
    %313 = math.exp %312 : vector<4x32xf32>
    %cst_66 = arith.constant 1.000000e+00 : f32
    %314 = vector.broadcast %cst_66 : f32 to vector<4x32xf32>
    %315 = arith.addf %314, %313 : vector<4x32xf32>
    %316 = arith.divf %314, %315 : vector<4x32xf32>
    %317 = vector.extract_strided_slice %304 {offsets = [0, 64], sizes = [4, 32], strides = [1, 1]} : vector<4x128xf32> to vector<4x32xf32>
    %318 = math.tanh %317 : vector<4x32xf32>
    %319 = vector.extract_strided_slice %304 {offsets = [0, 96], sizes = [4, 32], strides = [1, 1]} : vector<4x128xf32> to vector<4x32xf32>
    %320 = arith.negf %319 : vector<4x32xf32>
    %321 = math.exp %320 : vector<4x32xf32>
    %cst_67 = arith.constant 1.000000e+00 : f32
    %322 = vector.broadcast %cst_67 : f32 to vector<4x32xf32>
    %323 = arith.addf %322, %321 : vector<4x32xf32>
    %324 = arith.divf %322, %323 : vector<4x32xf32>
    %325 = arith.mulf %316, %298 : vector<4x32xf32>
    %326 = arith.mulf %310, %318 : vector<4x32xf32>
    %327 = arith.addf %325, %326 : vector<4x32xf32>
    %328 = math.tanh %327 : vector<4x32xf32>
    %329 = arith.mulf %324, %328 : vector<4x32xf32>
    %330 = arith.index_cast %c7_i32 : i32 to index
    %c0_68 = arith.constant 0 : index
    %c0_69 = arith.constant 0 : index
    %331 = vector.load %arg1[%330, %c0_68, %c0_69] : memref<8x4x1xf32, #tpu.memory_space<vmem>>, vector<1x4x1xf32>
    %332 = vector.shape_cast %331 : vector<1x4x1xf32> to vector<4x1xf32>
    %333 = arith.subf %329, %294 : vector<4x32xf32>
    %334 = vector.broadcast %332 : vector<4x1xf32> to vector<4x32xf32>
    %335 = arith.mulf %334, %333 : vector<4x32xf32>
    %336 = arith.addf %294, %335 : vector<4x32xf32>
    %337 = arith.subf %327, %298 : vector<4x32xf32>
    %338 = vector.broadcast %332 : vector<4x1xf32> to vector<4x32xf32>
    %339 = arith.mulf %338, %337 : vector<4x32xf32>
    %340 = arith.addf %298, %339 : vector<4x32xf32>
    %c8_i32 = arith.constant 8 : i32
    %341 = arith.truncf %336 : vector<4x32xf32> to vector<4x32xbf16>
    %cst_70 = arith.constant dense<0.000000e+00> : vector<4x4xf32>
    %342 = tpu.matmul %341, %1, %cst_70 {dimension_numbers = #tpu.dot_dimension_numbers<[1], [0], [0], [1], [0, 0, 1, 1], [], []>} : vector<4x32xbf16>, vector<32x4xbf16>, vector<4x4xf32> -> vector<4x4xf32>
    %343 = arith.truncf %340 : vector<4x32xf32> to vector<4x32xbf16>
    %cst_71 = arith.constant dense<0.000000e+00> : vector<4x4xf32>
    %344 = tpu.matmul %343, %2, %cst_71 {dimension_numbers = #tpu.dot_dimension_numbers<[1], [0], [0], [1], [0, 0, 1, 1], [], []>} : vector<4x32xbf16>, vector<32x4xbf16>, vector<4x4xf32> -> vector<4x4xf32>
    %345 = arith.addf %342, %344 : vector<4x4xf32>
    %c0_72 = arith.constant 0 : index
    %c0_73 = arith.constant 0 : index
    %346 = vector.load %arg5[%c0_72, %c0_73] : memref<1x4xf32, #tpu.memory_space<vmem>>, vector<1x4xf32>
    %347 = vector.broadcast %346 : vector<1x4xf32> to vector<4x4xf32>
    %348 = arith.addf %345, %347 : vector<4x4xf32>
    %cst_74 = arith.constant dense<0xFF800000> : vector<4xf32>
    %349 = vector.multi_reduction <maximumf>, %348, %cst_74 [1] : vector<4x4xf32> to vector<4xf32>
    %350 = vector.shape_cast %349 : vector<4xf32> to vector<4x1xf32>
    %351 = vector.broadcast %350 : vector<4x1xf32> to vector<4x4xf32>
    %352 = arith.subf %348, %351 : vector<4x4xf32>
    %353 = math.exp %352 : vector<4x4xf32>
    %cst_75 = arith.constant dense<0.000000e+00> : vector<4xf32>
    %354 = vector.multi_reduction <add>, %353, %cst_75 [1] : vector<4x4xf32> to vector<4xf32>
    %355 = vector.shape_cast %354 : vector<4xf32> to vector<4x1xf32>
    %356 = tpu.reciprocal %355 {approx = true} : vector<4x1xf32> -> vector<4x1xf32>
    %357 = vector.broadcast %356 : vector<4x1xf32> to vector<4x4xf32>
    %358 = arith.mulf %353, %357 : vector<4x4xf32>
    %c0_76 = arith.constant 0 : index
    %c0_77 = arith.constant 0 : index
    %359 = vector.load %arg6[%c0_76, %c0_77] : memref<4x4xf32, #tpu.memory_space<vmem>>, vector<4x4xf32>
    tpu.vector_store %arg6[%c0_76, %c0_77], %358 {strides = array<i32>} : memref<4x4xf32, #tpu.memory_space<vmem>>, vector<4x4xf32>,
    return
  }
}

</mosaic_0001>

<llo_original>
// kernel: tpu_custom_call.1
$region0: #{tpu_custom_call.1}
  #allocation0 [shape = 'u32[]', space=smem, size = 0x4, offset = 0x4, fixed_abs, tag = 'smem constant byte address 0x4 - core index']
  #allocation1 [shape = 'u32[144,128]{1,0:T(1,128)}', space=vmem, size = 0x12000, scoped, tag = 'internal scratch']
  %s0 = inlined_call_operand.vmem [shape: f32[8,4,128], index: 0, kind: input, shape index: {}]
  %s1 = inlined_call_operand.vmem [shape: f32[8,4,1], index: 1, kind: input, shape index: {}]
  %s2 = inlined_call_operand.vmem [shape: bf16[32,128], index: 2, kind: input, shape index: {}]
  %s3 = inlined_call_operand.vmem [shape: bf16[32,4], index: 3, kind: input, shape index: {}]
  %s4 = inlined_call_operand.vmem [shape: bf16[32,4], index: 4, kind: input, shape index: {}]
  %s5 = inlined_call_operand.vmem [shape: f32[1,4], index: 5, kind: input, shape index: {}]
  %s6 = inlined_call_operand.hbm [shape: f32[4,4], index: 6, kind: output, shape index: {}]
  %s7 = sld [smem:[#allocation0]]
  $region34: #{tpu_custom_call.1} parent=0
    _
  %s9 = ssub.s32 1, %s7
  %s10 = scalar_select 0, %s9, %s7
  $region1: #{tpu_custom_call.1} parent=0
    #allocation2 [shape = 'u8[2048]{0}', space=vmem, size = 0x800, scoped, tag = 'output window, operand 0, single buffered']
    #allocation3 [shape = 's32[1]{0}', space=sflag, size = 0x4, scoped, tag = 'scoped memory for tpu_custom_call.1']
    %11 = vsyncpa [#allocation3], 0
    // Predicated region
    $region2: #{tpu_custom_call.1} parent=1 // pred_check
      _
    $region3: #{tpu_custom_call.1} parent=1 // pred_check_branch
      %13 = sbr.rel (0) target = $region5
    $region4: #{tpu_custom_call.1} parent=1 // pred_region
      _
    $region5: #{tpu_custom_call.1} parent=1 // pred_fallthru
      _
    // Predicated region
    $region6: #{tpu_custom_call.1} parent=1 // pred_check
      _
    $region7: #{tpu_custom_call.1} parent=1 // pred_check_branch
      %15 = sbr.rel (0) target = $region9
    $region8: #{tpu_custom_call.1} parent=1 // pred_region
      _
    $region9: #{tpu_custom_call.1} parent=1 // pred_fallthru
      _
    // Predicated region
    $region10: #{tpu_custom_call.1} parent=1 // pred_check
      _
    $region11: #{tpu_custom_call.1} parent=1 // pred_check_branch
      %17 = sbr.rel (0) target = $region13
    $region12: #{tpu_custom_call.1} parent=1 // pred_region
      _
    $region13: #{tpu_custom_call.1} parent=1 // pred_fallthru
      _
    // Predicated region
    $region14: #{tpu_custom_call.1} parent=1 // pred_check
      _
    $region15: #{tpu_custom_call.1} parent=1 // pred_check_branch
      %19 = sbr.rel (0) target = $region17
    $region16: #{tpu_custom_call.1} parent=1 // pred_region
      _
    $region17: #{tpu_custom_call.1} parent=1 // pred_fallthru
      _
    // Predicated region
    $region18: #{tpu_custom_call.1} parent=1 // pred_check
      _
    $region19: #{tpu_custom_call.1} parent=1 // pred_check_branch
      %21 = sbr.rel (0) target = $region21
    $region20: #{tpu_custom_call.1} parent=1 // pred_region
      _
    $region21: #{tpu_custom_call.1} parent=1 // pred_fallthru
      _
    // Predicated region
    $region22: #{tpu_custom_call.1} parent=1 // pred_check
      _
    $region23: #{tpu_custom_call.1} parent=1 // pred_check_branch
      %23 = sbr.rel (0) target = $region25
    $region24: #{tpu_custom_call.1} parent=1 // pred_region
      _
    $region25: #{tpu_custom_call.1} parent=1 // pred_fallthru
      _
    %v25 = vld [vmem:[%s2] sm:$0xf]
    %v26 = vld [vmem:[%s2 + $0x4] sm:$0xf]
    %v27 = vld [vmem:[%s2 + $0x8] sm:$0xf]
    %v28 = vld [vmem:[%s2 + $0xc] sm:$0xf]
    %v29 = vld [vmem:[%s3] sm:$0xf]
    %v30 = vld [vmem:[%s3 + $0x4] sm:$0xf]
    %v31 = vld [vmem:[%s3 + $0x8] sm:$0xf]
    %v32 = vld [vmem:[%s3 + $0xc] sm:$0xf]
    %v33 = vld [vmem:[%s4] sm:$0xf]
    %v34 = vld [vmem:[%s4 + $0x4] sm:$0xf]
    %v35 = vld [vmem:[%s4 + $0x8] sm:$0xf]
    %v36 = vld [vmem:[%s4 + $0xc] sm:$0xf]
    %v37 = vld [vmem:[%s0] sm:$0xf]
    %v42 = vunpack.c.l.b16 %v25
    %v43 = vunpack.c.l.b16 %v26
    %v44 = vunpack.c.l.b16 %v27
    %v45 = vunpack.c.l.b16 %v28
    %v46 = vpack.c.b16 %v43, %v42
    %v47 = vpack.c.b16 %v45, %v44
    %vm50 = vcmask 261120
    %v52 = vsel %vm50, 0, 0
    %54 = vmatprep.subr.bf16.mxu0 0
    %55 = vmatpush1.bf16.msra.mxu0 %v46
    %56 = vmatprep.subr.bf16.mxu0 0
    %57 = vmatpush1.bf16.msra.mxu0 %v47
    %58 = vmatprep.subr.bf16.mxu0 0
    %59 = vmatpush1.bf16.msra.mxu0 0
    %60 = vmatprep.subr.bf16.mxu0 0
    %61 = vmatpush1.bf16.msra.mxu0 0
    %62 = vmatprep.subr.bf16.mxu0 0
    %63 = vmatpush1.bf16.msra.mxu0 0
    %64 = vmatprep.subr.bf16.mxu0 0
    %65 = vmatpush1.bf16.msra.mxu0 0
    %66 = vmatprep.subr.bf16.mxu0 0
    %67 = vmatpush1.bf16.msra.mxu0 0
    %68 = vmatprep.subr.bf16.mxu0 0
    %69 = vmatpush1.bf16.msra.mxu0 0
    %70 = vmatprep.subr.bf16.mxu0 0
    %71 = vmatpush1.bf16.msra.mxu0 0
    %72 = vmatprep.subr.bf16.mxu0 0
    %73 = vmatpush1.bf16.msra.mxu0 0
    %74 = vmatprep.subr.bf16.mxu0 0
    %75 = vmatpush1.bf16.msra.mxu0 0
    %76 = vmatprep.subr.bf16.mxu0 0
    %77 = vmatpush1.bf16.msra.mxu0 0
    %78 = vmatprep.subr.bf16.mxu0 0
    %79 = vmatpush1.bf16.msra.mxu0 0
    %80 = vmatprep.subr.bf16.mxu0 0
    %81 = vmatpush1.bf16.msra.mxu0 0
    %82 = vmatprep.subr.bf16.mxu0 0
    %83 = vmatpush1.bf16.msra.mxu0 0
    %84 = vmatprep.subr.bf16.mxu0 0
    %85 = vmatpush1.bf16.msra.mxu0 0
    %86 = vmatprep.mubr.bf16.mxu0 0
    %87 = vmatmul.mubr.bf16.gmra.mrb[0].mxu0 %v52
    %v88 = vpop.f32.mrb[0].mxu0
    %v89 = vadd.f32 0.0, %v88
    %v90 = vpop.f32.mrb[0].mxu0
    %v91 = vpop.f32.mrb[0].mxu0
    %v92 = vpop.f32.mrb[0].mxu0
    %93 = vdwg.mxu0
    %v94 = vadd.f32 %v37, %v89
    %v95 = vxor.u32 %v94, 2147483648
    %v96 = vmul.f32 %v95, 1.442695
    %v97 = vpow.pop %v96
    %v98 = vadd.f32 %v97, 1.0
    %v99 = vrcp.pop %v98
    %v100 = vmul.f32 1.0, %v99
    %v101 = vtanh.pop %v94
    %v102 = vmul.f32 %v100, 0.0
    %104 = vrot.lane.b32.xlu0 %v101, 64
    %v105 = vpop.permute.xlu0 %104
    %v107 = vmul.f32 %v100, %v105
    %109 = vrot.lane.b32.xlu0 %v107, 32
    %v110 = vpop.permute.xlu0 %109
    %v112 = vadd.f32 %v102, %v110
    %v113 = vtanh.pop %v112
    %115 = vrot.lane.b32.xlu0 %v113, 64
    %v116 = vpop.permute.xlu0 %115
    %v118 = vmul.f32 %v100, %v116
    %v119 = vld [vmem:[%s1] sm:$0xf]
    %121 = vset.pattern.permute.xlu0 0
    %122 = vperm.xlu0 %121, %v119
    %v123 = vpop.permute.xlu0 %122
    %v125 = vmul.f32 %v123, %v118
    %v126 = vadd.f32 %v125, 0.0
    %v127 = vmul.f32 %v123, %v112
    %v128 = vadd.f32 %v127, 0.0
    %s129 = scalar_lea.vmem %s0, 4
    %v130 = vld [vmem:[%s129] sm:$0xf]
    %v131 = vpack.c.bf16 %v126, %v126
    %133 = vrot.lane.b32.xlu0 %v131, 32
    %v134 = vpop.permute.xlu0 %133
    %v136 = vsel %vm50, %v134, 0
    %138 = vmatprep.subr.bf16.mxu0 0
    %139 = vmatpush1.bf16.msra.mxu0 %v46
    %140 = vmatprep.subr.bf16.mxu0 0
    %141 = vmatpush1.bf16.msra.mxu0 %v47
    %142 = vmatprep.subr.bf16.mxu0 0
    %143 = vmatpush1.bf16.msra.mxu0 0
    %144 = vmatprep.subr.bf16.mxu0 0
    %145 = vmatpush1.bf16.msra.mxu0 0
    %146 = vmatprep.subr.bf16.mxu0 0
    %147 = vmatpush1.bf16.msra.mxu0 0
    %148 = vmatprep.subr.bf16.mxu0 0
    %149 = vmatpush1.bf16.msra.mxu0 0
    %150 = vmatprep.subr.bf16.mxu0 0
    %151 = vmatpush1.bf16.msra.mxu0 0
    %152 = vmatprep.subr.bf16.mxu0 0
    %153 = vmatpush1.bf16.msra.mxu0 0
    %154 = vmatprep.subr.bf16.mxu0 0
    %155 = vmatpush1.bf16.msra.mxu0 0
    %156 = vmatprep.subr.bf16.mxu0 0
    %157 = vmatpush1.bf16.msra.mxu0 0
    %158 = vmatprep.subr.bf16.mxu0 0
    %159 = vmatpush1.bf16.msra.mxu0 0
    %160 = vmatprep.subr.bf16.mxu0 0
    %161 = vmatpush1.bf16.msra.mxu0 0
    %162 = vmatprep.subr.bf16.mxu0 0
    %163 = vmatpush1.bf16.msra.mxu0 0
    %164 = vmatprep.subr.bf16.mxu0 0
    %165 = vmatpush1.bf16.msra.mxu0 0
    %166 = vmatprep.subr.bf16.mxu0 0
    %167 = vmatpush1.bf16.msra.mxu0 0
    %168 = vmatprep.subr.bf16.mxu0 0
    %169 = vmatpush1.bf16.msra.mxu0 0
    %170 = vmatprep.mubr.bf16.mxu0 0
    %171 = vmatmul.mubr.bf16.gmra.mrb[0].mxu0 %v136
    %v172 = vpop.f32.mrb[0].mxu0
    %v173 = vadd.f32 0.0, %v172
    %v174 = vpop.f32.mrb[0].mxu0
    %v175 = vpop.f32.mrb[0].mxu0
    %v176 = vpop.f32.mrb[0].mxu0
    %177 = vdwg.mxu0
    %v178 = vadd.f32 %v130, %v173
    %v179 = vxor.u32 %v178, 2147483648
    %v180 = vmul.f32 %v179, 1.442695
    %v181 = vpow.pop %v180
    %v182 = vadd.f32 %v181, 1.0
    %v183 = vrcp.pop %v182
    %v184 = vmul.f32 1.0, %v183
    %v185 = vtanh.pop %v178
    %v186 = vmul.f32 %v184, %v128
    %188 = vrot.lane.b32.xlu0 %v185, 64
    %v189 = vpop.permute.xlu0 %188
    %v191 = vmul.f32 %v184, %v189
    %193 = vrot.lane.b32.xlu0 %v191, 32
    %v194 = vpop.permute.xlu0 %193
    %v196 = vadd.f32 %v186, %v194
    %v197 = vtanh.pop %v196
    %199 = vrot.lane.b32.xlu0 %v197, 64
    %v200 = vpop.permute.xlu0 %199
    %v202 = vmul.f32 %v184, %v200
    %s203 = scalar_lea.vmem %s1, 4
    %v204 = vld [vmem:[%s203] sm:$0xf]
    %v205 = vsub.f32 %v202, %v126
    %207 = vset.pattern.permute.xlu0 0
    %208 = vperm.xlu0 %207, %v204
    %v209 = vpop.permute.xlu0 %208
    %v211 = vmul.f32 %v209, %v205
    %v212 = vadd.f32 %v126, %v211
    %v213 = vsub.f32 %v196, %v128
    %v214 = vmul.f32 %v209, %v213
    %v215 = vadd.f32 %v128, %v214
    %s216 = scalar_lea.vmem %s0, 8
    %v217 = vld [vmem:[%s216] sm:$0xf]
    %v218 = vpack.c.bf16 %v212, %v212
    %220 = vrot.lane.b32.xlu0 %v218, 32
    %v221 = vpop.permute.xlu0 %220
    %v223 = vsel %vm50, %v221, 0
    %225 = vmatprep.subr.bf16.mxu0 0
    %226 = vmatpush1.bf16.msra.mxu0 %v46
    %227 = vmatprep.subr.bf16.mxu0 0
    %228 = vmatpush1.bf16.msra.mxu0 %v47
    %229 = vmatprep.subr.bf16.mxu0 0
    %230 = vmatpush1.bf16.msra.mxu0 0
    %231 = vmatprep.subr.bf16.mxu0 0
    %232 = vmatpush1.bf16.msra.mxu0 0
    %233 = vmatprep.subr.bf16.mxu0 0
    %234 = vmatpush1.bf16.msra.mxu0 0
    %235 = vmatprep.subr.bf16.mxu0 0
    %236 = vmatpush1.bf16.msra.mxu0 0
    %237 = vmatprep.subr.bf16.mxu0 0
    %238 = vmatpush1.bf16.msra.mxu0 0
    %239 = vmatprep.subr.bf16.mxu0 0
    %240 = vmatpush1.bf16.msra.mxu0 0
    %241 = vmatprep.subr.bf16.mxu0 0
    %242 = vmatpush1.bf16.msra.mxu0 0
    %243 = vmatprep.subr.bf16.mxu0 0
    %244 = vmatpush1.bf16.msra.mxu0 0
    %245 = vmatprep.subr.bf16.mxu0 0
    %246 = vmatpush1.bf16.msra.mxu0 0
    %247 = vmatprep.subr.bf16.mxu0 0
    %248 = vmatpush1.bf16.msra.mxu0 0
    %249 = vmatprep.subr.bf16.mxu0 0
    %250 = vmatpush1.bf16.msra.mxu0 0
    %251 = vmatprep.subr.bf16.mxu0 0
    %252 = vmatpush1.bf16.msra.mxu0 0
    %253 = vmatprep.subr.bf16.mxu0 0
    %254 = vmatpush1.bf16.msra.mxu0 0
    %255 = vmatprep.subr.bf16.mxu0 0
    %256 = vmatpush1.bf16.msra.mxu0 0
    %257 = vmatprep.mubr.bf16.mxu0 0
    %258 = vmatmul.mubr.bf16.gmra.mrb[0].mxu0 %v223
    %v259 = vpop.f32.mrb[0].mxu0
    %v260 = vadd.f32 0.0, %v259
    %v261 = vpop.f32.mrb[0].mxu0
    %v262 = vpop.f32.mrb[0].mxu0
    %v263 = vpop.f32.mrb[0].mxu0
    %264 = vdwg.mxu0
    %v265 = vadd.f32 %v217, %v260
    %v266 = vxor.u32 %v265, 2147483648
    %v267 = vmul.f32 %v266, 1.442695
    %v268 = vpow.pop %v267
    %v269 = vadd.f32 %v268, 1.0
    %v270 = vrcp.pop %v269
    %v271 = vmul.f32 1.0, %v270
    %v272 = vtanh.pop %v265
    %v273 = vmul.f32 %v271, %v215
    %275 = vrot.lane.b32.xlu0 %v272, 64
    %v276 = vpop.permute.xlu0 %275
    %v278 = vmul.f32 %v271, %v276
    %280 = vrot.lane.b32.xlu0 %v278, 32
    %v281 = vpop.permute.xlu0 %280
    %v283 = vadd.f32 %v273, %v281
    %v284 = vtanh.pop %v283
    %286 = vrot.lane.b32.xlu0 %v284, 64
    %v287 = vpop.permute.xlu0 %286
    %v289 = vmul.f32 %v271, %v287
    %s290 = scalar_lea.vmem %s1, 8
    %v291 = vld [vmem:[%s290] sm:$0xf]
    %v292 = vsub.f32 %v289, %v212
    %294 = vset.pattern.permute.xlu0 0
    %295 = vperm.xlu0 %294, %v291
    %v296 = vpop.permute.xlu0 %295
    %v298 = vmul.f32 %v296, %v292
    %v299 = vadd.f32 %v212, %v298
    %v300 = vsub.f32 %v283, %v215
    %v301 = vmul.f32 %v296, %v300
    %v302 = vadd.f32 %v215, %v301
    %s303 = scalar_lea.vmem %s0, 12
    %v304 = vld [vmem:[%s303] sm:$0xf]
    %v305 = vpack.c.bf16 %v299, %v299
    %307 = vrot.lane.b32.xlu0 %v305, 32
    %v308 = vpop.permute.xlu0 %307
    %v310 = vsel %vm50, %v308, 0
    %312 = vmatprep.subr.bf16.mxu0 0
    %313 = vmatpush1.bf16.msra.mxu0 %v46
    %314 = vmatprep.subr.bf16.mxu0 0
    %315 = vmatpush1.bf16.msra.mxu0 %v47
    %316 = vmatprep.subr.bf16.mxu0 0
    %317 = vmatpush1.bf16.msra.mxu0 0
    %318 = vmatprep.subr.bf16.mxu0 0
    %319 = vmatpush1.bf16.msra.mxu0 0
    %320 = vmatprep.subr.bf16.mxu0 0
    %321 = vmatpush1.bf16.msra.mxu0 0
    %322 = vmatprep.subr.bf16.mxu0 0
    %323 = vmatpush1.bf16.msra.mxu0 0
    %324 = vmatprep.subr.bf16.mxu0 0
    %325 = vmatpush1.bf16.msra.mxu0 0
    %326 = vmatprep.subr.bf16.mxu0 0
    %327 = vmatpush1.bf16.msra.mxu0 0
    %328 = vmatprep.subr.bf16.mxu0 0
    %329 = vmatpush1.bf16.msra.mxu0 0
    %330 = vmatprep.subr.bf16.mxu0 0
    %331 = vmatpush1.bf16.msra.mxu0 0
    %332 = vmatprep.subr.bf16.mxu0 0
    %333 = vmatpush1.bf16.msra.mxu0 0
    %334 = vmatprep.subr.bf16.mxu0 0
    %335 = vmatpush1.bf16.msra.mxu0 0
    %336 = vmatprep.subr.bf16.mxu0 0
    %337 = vmatpush1.bf16.msra.mxu0 0
    %338 = vmatprep.subr.bf16.mxu0 0
    %339 = vmatpush1.bf16.msra.mxu0 0
    %340 = vmatprep.subr.bf16.mxu0 0
    %341 = vmatpush1.bf16.msra.mxu0 0
    %342 = vmatprep.subr.bf16.mxu0 0
    %343 = vmatpush1.bf16.msra.mxu0 0
    %344 = vmatprep.mubr.bf16.mxu0 0
    %345 = vmatmul.mubr.bf16.gmra.mrb[0].mxu0 %v310
    %v346 = vpop.f32.mrb[0].mxu0
    %v347 = vadd.f32 0.0, %v346
    %v348 = vpop.f32.mrb[0].mxu0
    %v349 = vpop.f32.mrb[0].mxu0
    %v350 = vpop.f32.mrb[0].mxu0
    %351 = vdwg.mxu0
    %v352 = vadd.f32 %v304, %v347
    %v353 = vxor.u32 %v352, 2147483648
    %v354 = vmul.f32 %v353, 1.442695
    %v355 = vpow.pop %v354
    %v356 = vadd.f32 %v355, 1.0
    %v357 = vrcp.pop %v356
    %v358 = vmul.f32 1.0, %v357
    %v359 = vtanh.pop %v352
    %v360 = vmul.f32 %v358, %v302
    %362 = vrot.lane.b32.xlu0 %v359, 64
    %v363 = vpop.permute.xlu0 %362
    %v365 = vmul.f32 %v358, %v363
    %367 = vrot.lane.b32.xlu0 %v365, 32
    %v368 = vpop.permute.xlu0 %367
    %v370 = vadd.f32 %v360, %v368
    %v371 = vtanh.pop %v370
    %373 = vrot.lane.b32.xlu0 %v371, 64
    %v374 = vpop.permute.xlu0 %373
    %v376 = vmul.f32 %v358, %v374
    %s377 = scalar_lea.vmem %s1, 12
    %v378 = vld [vmem:[%s377] sm:$0xf]
    %v379 = vsub.f32 %v376, %v299
    %381 = vset.pattern.permute.xlu0 0
    %382 = vperm.xlu0 %381, %v378
    %v383 = vpop.permute.xlu0 %382
    %v385 = vmul.f32 %v383, %v379
    %v386 = vadd.f32 %v299, %v385
    %v387 = vsub.f32 %v370, %v302
    %v388 = vmul.f32 %v383, %v387
    %v389 = vadd.f32 %v302, %v388
    %s390 = scalar_lea.vmem %s0, 16
    %v391 = vld [vmem:[%s390] sm:$0xf]
    %v392 = vpack.c.bf16 %v386, %v386
    %394 = vrot.lane.b32.xlu0 %v392, 32
    %v395 = vpop.permute.xlu0 %394
    %v397 = vsel %vm50, %v395, 0
    %399 = vmatprep.subr.bf16.mxu0 0
    %400 = vmatpush1.bf16.msra.mxu0 %v46
    %401 = vmatprep.subr.bf16.mxu0 0
    %402 = vmatpush1.bf16.msra.mxu0 %v47
    %403 = vmatprep.subr.bf16.mxu0 0
    %404 = vmatpush1.bf16.msra.mxu0 0
    %405 = vmatprep.subr.bf16.mxu0 0
    %406 = vmatpush1.bf16.msra.mxu0 0
    %407 = vmatprep.subr.bf16.mxu0 0
    %408 = vmatpush1.bf16.msra.mxu0 0
    %409 = vmatprep.subr.bf16.mxu0 0
    %410 = vmatpush1.bf16.msra.mxu0 0
    %411 = vmatprep.subr.bf16.mxu0 0
    %412 = vmatpush1.bf16.msra.mxu0 0
    %413 = vmatprep.subr.bf16.mxu0 0
    %414 = vmatpush1.bf16.msra.mxu0 0
    %415 = vmatprep.subr.bf16.mxu0 0
    %416 = vmatpush1.bf16.msra.mxu0 0
    %417 = vmatprep.subr.bf16.mxu0 0
    %418 = vmatpush1.bf16.msra.mxu0 0
    %419 = vmatprep.subr.bf16.mxu0 0
    %420 = vmatpush1.bf16.msra.mxu0 0
    %421 = vmatprep.subr.bf16.mxu0 0
    %422 = vmatpush1.bf16.msra.mxu0 0
    %423 = vmatprep.subr.bf16.mxu0 0
    %424 = vmatpush1.bf16.msra.mxu0 0
    %425 = vmatprep.subr.bf16.mxu0 0
    %426 = vmatpush1.bf16.msra.mxu0 0
    %427 = vmatprep.subr.bf16.mxu0 0
    %428 = vmatpush1.bf16.msra.mxu0 0
    %429 = vmatprep.subr.bf16.mxu0 0
    %430 = vmatpush1.bf16.msra.mxu0 0
    %431 = vmatprep.mubr.bf16.mxu0 0
    %432 = vmatmul.mubr.bf16.gmra.mrb[0].mxu0 %v397
    %v433 = vpop.f32.mrb[0].mxu0
    %v434 = vadd.f32 0.0, %v433
    %v435 = vpop.f32.mrb[0].mxu0
    %v436 = vpop.f32.mrb[0].mxu0
    %v437 = vpop.f32.mrb[0].mxu0
    %438 = vdwg.mxu0
    %v439 = vadd.f32 %v391, %v434
    %v440 = vxor.u32 %v439, 2147483648
    %v441 = vmul.f32 %v440, 1.442695
    %v442 = vpow.pop %v441
    %v443 = vadd.f32 %v442, 1.0
    %v444 = vrcp.pop %v443
    %v445 = vmul.f32 1.0, %v444
    %v446 = vtanh.pop %v439
    %v447 = vmul.f32 %v445, %v389
    %449 = vrot.lane.b32.xlu0 %v446, 64
    %v450 = vpop.permute.xlu0 %449
    %v452 = vmul.f32 %v445, %v450
    %454 = vrot.lane.b32.xlu0 %v452, 32
    %v455 = vpop.permute.xlu0 %454
    %v457 = vadd.f32 %v447, %v455
    %v458 = vtanh.pop %v457
    %460 = vrot.lane.b32.xlu0 %v458, 64
    %v461 = vpop.permute.xlu0 %460
    %v463 = vmul.f32 %v445, %v461
    %s464 = scalar_lea.vmem %s1, 16
    %v465 = vld [vmem:[%s464] sm:$0xf]
    %v466 = vsub.f32 %v463, %v386
    %468 = vset.pattern.permute.xlu0 0
    %469 = vperm.xlu0 %468, %v465
    %v470 = vpop.permute.xlu0 %469
    %v472 = vmul.f32 %v470, %v466
    %v473 = vadd.f32 %v386, %v472
    %v474 = vsub.f32 %v457, %v389
    %v475 = vmul.f32 %v470, %v474
    %v476 = vadd.f32 %v389, %v475
    %s477 = scalar_lea.vmem %s0, 20
    %v478 = vld [vmem:[%s477] sm:$0xf]
    %v479 = vpack.c.bf16 %v473, %v473
    %481 = vrot.lane.b32.xlu0 %v479, 32
    %v482 = vpop.permute.xlu0 %481
    %v484 = vsel %vm50, %v482, 0
    %486 = vmatprep.subr.bf16.mxu0 0
    %487 = vmatpush1.bf16.msra.mxu0 %v46
    %488 = vmatprep.subr.bf16.mxu0 0
    %489 = vmatpush1.bf16.msra.mxu0 %v47
    %490 = vmatprep.subr.bf16.mxu0 0
    %491 = vmatpush1.bf16.msra.mxu0 0
    %492 = vmatprep.subr.bf16.mxu0 0
    %493 = vmatpush1.bf16.msra.mxu0 0
    %494 = vmatprep.subr.bf16.mxu0 0
    %495 = vmatpush1.bf16.msra.mxu0 0
    %496 = vmatprep.subr.bf16.mxu0 0
    %497 = vmatpush1.bf16.msra.mxu0 0
    %498 = vmatprep.subr.bf16.mxu0 0
    %499 = vmatpush1.bf16.msra.mxu0 0
    %500 = vmatprep.subr.bf16.mxu0 0
    %501 = vmatpush1.bf16.msra.mxu0 0
    %502 = vmatprep.subr.bf16.mxu0 0
    %503 = vmatpush1.bf16.msra.mxu0 0
    %504 = vmatprep.subr.bf16.mxu0 0
    %505 = vmatpush1.bf16.msra.mxu0 0
    %506 = vmatprep.subr.bf16.mxu0 0
    %507 = vmatpush1.bf16.msra.mxu0 0
    %508 = vmatprep.subr.bf16.mxu0 0
    %509 = vmatpush1.bf16.msra.mxu0 0
    %510 = vmatprep.subr.bf16.mxu0 0
    %511 = vmatpush1.bf16.msra.mxu0 0
    %512 = vmatprep.subr.bf16.mxu0 0
    %513 = vmatpush1.bf16.msra.mxu0 0
    %514 = vmatprep.subr.bf16.mxu0 0
    %515 = vmatpush1.bf16.msra.mxu0 0
    %516 = vmatprep.subr.bf16.mxu0 0
    %517 = vmatpush1.bf16.msra.mxu0 0
    %518 = vmatprep.mubr.bf16.mxu0 0
    %519 = vmatmul.mubr.bf16.gmra.mrb[0].mxu0 %v484
    %v520 = vpop.f32.mrb[0].mxu0
    %v521 = vadd.f32 0.0, %v520
    %v522 = vpop.f32.mrb[0].mxu0
    %v523 = vpop.f32.mrb[0].mxu0
    %v524 = vpop.f32.mrb[0].mxu0
    %525 = vdwg.mxu0
    %v526 = vadd.f32 %v478, %v521
    %v527 = vxor.u32 %v526, 2147483648
    %v528 = vmul.f32 %v527, 1.442695
    %v529 = vpow.pop %v528
    %v530 = vadd.f32 %v529, 1.0
    %v531 = vrcp.pop %v530
    %v532 = vmul.f32 1.0, %v531
    %v533 = vtanh.pop %v526
    %v534 = vmul.f32 %v532, %v476
    %536 = vrot.lane.b32.xlu0 %v533, 64
    %v537 = vpop.permute.xlu0 %536
    %v539 = vmul.f32 %v532, %v537
    %541 = vrot.lane.b32.xlu0 %v539, 32
    %v542 = vpop.permute.xlu0 %541
    %v544 = vadd.f32 %v534, %v542
    %v545 = vtanh.pop %v544
    %547 = vrot.lane.b32.xlu0 %v545, 64
    %v548 = vpop.permute.xlu0 %547
    %v550 = vmul.f32 %v532, %v548
    %s551 = scalar_lea.vmem %s1, 20
    %v552 = vld [vmem:[%s551] sm:$0xf]
    %v553 = vsub.f32 %v550, %v473
    %555 = vset.pattern.permute.xlu0 0
    %556 = vperm.xlu0 %555, %v552
    %v557 = vpop.permute.xlu0 %556
    %v559 = vmul.f32 %v557, %v553
    %v560 = vadd.f32 %v473, %v559
    %v561 = vsub.f32 %v544, %v476
    %v562 = vmul.f32 %v557, %v561
    %v563 = vadd.f32 %v476, %v562
    %s564 = scalar_lea.vmem %s0, 24
    %v565 = vld [vmem:[%s564] sm:$0xf]
    %v566 = vpack.c.bf16 %v560, %v560
    %568 = vrot.lane.b32.xlu0 %v566, 32
    %v569 = vpop.permute.xlu0 %568
    %v571 = vsel %vm50, %v569, 0
    %573 = vmatprep.subr.bf16.mxu0 0
    %574 = vmatpush1.bf16.msra.mxu0 %v46
    %575 = vmatprep.subr.bf16.mxu0 0
    %576 = vmatpush1.bf16.msra.mxu0 %v47
    %577 = vmatprep.subr.bf16.mxu0 0
    %578 = vmatpush1.bf16.msra.mxu0 0
    %579 = vmatprep.subr.bf16.mxu0 0
    %580 = vmatpush1.bf16.msra.mxu0 0
    %581 = vmatprep.subr.bf16.mxu0 0
    %582 = vmatpush1.bf16.msra.mxu0 0
    %583 = vmatprep.subr.bf16.mxu0 0
    %584 = vmatpush1.bf16.msra.mxu0 0
    %585 = vmatprep.subr.bf16.mxu0 0
    %586 = vmatpush1.bf16.msra.mxu0 0
    %587 = vmatprep.subr.bf16.mxu0 0
    %588 = vmatpush1.bf16.msra.mxu0 0
    %589 = vmatprep.subr.bf16.mxu0 0
    %590 = vmatpush1.bf16.msra.mxu0 0
    %591 = vmatprep.subr.bf16.mxu0 0
    %592 = vmatpush1.bf16.msra.mxu0 0
    %593 = vmatprep.subr.bf16.mxu0 0
    %594 = vmatpush1.bf16.msra.mxu0 0
    %595 = vmatprep.subr.bf16.mxu0 0
    %596 = vmatpush1.bf16.msra.mxu0 0
    %597 = vmatprep.subr.bf16.mxu0 0
    %598 = vmatpush1.bf16.msra.mxu0 0
    %599 = vmatprep.subr.bf16.mxu0 0
    %600 = vmatpush1.bf16.msra.mxu0 0
    %601 = vmatprep.subr.bf16.mxu0 0
    %602 = vmatpush1.bf16.msra.mxu0 0
    %603 = vmatprep.subr.bf16.mxu0 0
    %604 = vmatpush1.bf16.msra.mxu0 0
    %605 = vmatprep.mubr.bf16.mxu0 0
    %606 = vmatmul.mubr.bf16.gmra.mrb[0].mxu0 %v571
    %v607 = vpop.f32.mrb[0].mxu0
    %v608 = vadd.f32 0.0, %v607
    %v609 = vpop.f32.mrb[0].mxu0
    %v610 = vpop.f32.mrb[0].mxu0
    %v611 = vpop.f32.mrb[0].mxu0
    %612 = vdwg.mxu0
    %v613 = vadd.f32 %v565, %v608
    %v614 = vxor.u32 %v613, 2147483648
    %v615 = vmul.f32 %v614, 1.442695
    %v616 = vpow.pop %v615
    %v617 = vadd.f32 %v616, 1.0
    %v618 = vrcp.pop %v617
    %v619 = vmul.f32 1.0, %v618
    %v620 = vtanh.pop %v613
    %v621 = vmul.f32 %v619, %v563
    %623 = vrot.lane.b32.xlu0 %v620, 64
    %v624 = vpop.permute.xlu0 %623
    %v626 = vmul.f32 %v619, %v624
    %628 = vrot.lane.b32.xlu0 %v626, 32
    %v629 = vpop.permute.xlu0 %628
    %v631 = vadd.f32 %v621, %v629
    %v632 = vtanh.pop %v631
    %634 = vrot.lane.b32.xlu0 %v632, 64
    %v635 = vpop.permute.xlu0 %634
    %v637 = vmul.f32 %v619, %v635
    %s638 = scalar_lea.vmem %s1, 24
    %v639 = vld [vmem:[%s638] sm:$0xf]
    %v640 = vsub.f32 %v637, %v560
    %642 = vset.pattern.permute.xlu0 0
    %643 = vperm.xlu0 %642, %v639
    %v644 = vpop.permute.xlu0 %643
    %v646 = vmul.f32 %v644, %v640
    %v647 = vadd.f32 %v560, %v646
    %v648 = vsub.f32 %v631, %v563
    %v649 = vmul.f32 %v644, %v648
    %v650 = vadd.f32 %v563, %v649
    %s651 = scalar_lea.vmem %s0, 28
    %v652 = vld [vmem:[%s651] sm:$0xf]
    %v653 = vpack.c.bf16 %v647, %v647
    %655 = vrot.lane.b32.xlu0 %v653, 32
    %v656 = vpop.permute.xlu0 %655
    %v658 = vsel %vm50, %v656, 0
    %660 = vmatprep.subr.bf16.mxu0 0
    %661 = vmatpush1.bf16.msra.mxu0 %v46
    %662 = vmatprep.subr.bf16.mxu0 0
    %663 = vmatpush1.bf16.msra.mxu0 %v47
    %664 = vmatprep.subr.bf16.mxu0 0
    %665 = vmatpush1.bf16.msra.mxu0 0
    %666 = vmatprep.subr.bf16.mxu0 0
    %667 = vmatpush1.bf16.msra.mxu0 0
    %668 = vmatprep.subr.bf16.mxu0 0
    %669 = vmatpush1.bf16.msra.mxu0 0
    %670 = vmatprep.subr.bf16.mxu0 0
    %671 = vmatpush1.bf16.msra.mxu0 0
    %672 = vmatprep.subr.bf16.mxu0 0
    %673 = vmatpush1.bf16.msra.mxu0 0
    %674 = vmatprep.subr.bf16.mxu0 0
    %675 = vmatpush1.bf16.msra.mxu0 0
    %676 = vmatprep.subr.bf16.mxu0 0
    %677 = vmatpush1.bf16.msra.mxu0 0
    %678 = vmatprep.subr.bf16.mxu0 0
    %679 = vmatpush1.bf16.msra.mxu0 0
    %680 = vmatprep.subr.bf16.mxu0 0
    %681 = vmatpush1.bf16.msra.mxu0 0
    %682 = vmatprep.subr.bf16.mxu0 0
    %683 = vmatpush1.bf16.msra.mxu0 0
    %684 = vmatprep.subr.bf16.mxu0 0
    %685 = vmatpush1.bf16.msra.mxu0 0
    %686 = vmatprep.subr.bf16.mxu0 0
    %687 = vmatpush1.bf16.msra.mxu0 0
    %688 = vmatprep.subr.bf16.mxu0 0
    %689 = vmatpush1.bf16.msra.mxu0 0
    %690 = vmatprep.subr.bf16.mxu0 0
    %691 = vmatpush1.bf16.msra.mxu0 0
    %692 = vmatprep.mubr.bf16.mxu0 0
    %693 = vmatmul.mubr.bf16.gmra.mrb[0].mxu0 %v658
    %v694 = vpop.f32.mrb[0].mxu0
    %v695 = vadd.f32 0.0, %v694
    %v696 = vpop.f32.mrb[0].mxu0
    %v697 = vpop.f32.mrb[0].mxu0
    %v698 = vpop.f32.mrb[0].mxu0
    %699 = vdwg.mxu0
    %v700 = vadd.f32 %v652, %v695
    %v701 = vxor.u32 %v700, 2147483648
    %v702 = vmul.f32 %v701, 1.442695
    %v703 = vpow.pop %v702
    %v704 = vadd.f32 %v703, 1.0
    %v705 = vrcp.pop %v704
    %v706 = vmul.f32 1.0, %v705
    %v707 = vtanh.pop %v700
    %v708 = vmul.f32 %v706, %v650
    %710 = vrot.lane.b32.xlu0 %v707, 64
    %v711 = vpop.permute.xlu0 %710
    %v713 = vmul.f32 %v706, %v711
    %715 = vrot.lane.b32.xlu0 %v713, 32
    %v716 = vpop.permute.xlu0 %715
    %v718 = vadd.f32 %v708, %v716
    %v719 = vtanh.pop %v718
    %721 = vrot.lane.b32.xlu0 %v719, 64
    %v722 = vpop.permute.xlu0 %721
    %v724 = vmul.f32 %v706, %v722
    %s725 = scalar_lea.vmem %s1, 28
    %v726 = vld [vmem:[%s725] sm:$0xf]
    %v727 = vsub.f32 %v724, %v647
    %729 = vset.pattern.permute.xlu0 0
    %730 = vperm.xlu0 %729, %v726
    %v731 = vpop.permute.xlu0 %730
    %v733 = vmul.f32 %v731, %v727
    %v734 = vadd.f32 %v647, %v733
    %v735 = vsub.f32 %v718, %v650
    %v736 = vmul.f32 %v731, %v735
    %v737 = vadd.f32 %v650, %v736
    %v738 = vpack.c.bf16 %v734, %v734
    %v739 = vpack.c.bf16 %v737, %v737
    %741 = vrot.lane.b32.xlu0 %v739, 96
    %v742 = vpop.permute.xlu0 %741
    %v747 = vunpack.c.l.b16 %v33
    %v748 = vunpack.c.l.b16 %v34
    %v749 = vunpack.c.l.b16 %v35
    %v750 = vunpack.c.l.b16 %v36
    %v751 = vpack.c.b16 %v748, %v747
    %v752 = vpack.c.b16 %v750, %v749
    %v756 = vsel %vm50, %v742, 0
    %758 = vmatprep.subr.bf16.mxu0 0
    %759 = vmatpush1.bf16.msra.mxu0 %v751
    %760 = vmatprep.subr.bf16.mxu0 0
    %761 = vmatpush1.bf16.msra.mxu0 %v752
    %762 = vmatprep.subr.bf16.mxu0 0
    %763 = vmatpush1.bf16.msra.mxu0 0
    %764 = vmatprep.subr.bf16.mxu0 0
    %765 = vmatpush1.bf16.msra.mxu0 0
    %766 = vmatprep.subr.bf16.mxu0 0
    %767 = vmatpush1.bf16.msra.mxu0 0
    %768 = vmatprep.subr.bf16.mxu0 0
    %769 = vmatpush1.bf16.msra.mxu0 0
    %770 = vmatprep.subr.bf16.mxu0 0
    %771 = vmatpush1.bf16.msra.mxu0 0
    %772 = vmatprep.subr.bf16.mxu0 0
    %773 = vmatpush1.bf16.msra.mxu0 0
    %774 = vmatprep.subr.bf16.mxu0 0
    %775 = vmatpush1.bf16.msra.mxu0 0
    %776 = vmatprep.subr.bf16.mxu0 0
    %777 = vmatpush1.bf16.msra.mxu0 0
    %778 = vmatprep.subr.bf16.mxu0 0
    %779 = vmatpush1.bf16.msra.mxu0 0
    %780 = vmatprep.subr.bf16.mxu0 0
    %781 = vmatpush1.bf16.msra.mxu0 0
    %782 = vmatprep.subr.bf16.mxu0 0
    %783 = vmatpush1.bf16.msra.mxu0 0
    %784 = vmatprep.subr.bf16.mxu0 0
    %785 = vmatpush1.bf16.msra.mxu0 0
    %786 = vmatprep.subr.bf16.mxu0 0
    %787 = vmatpush1.bf16.msra.mxu0 0
    %788 = vmatprep.subr.bf16.mxu0 0
    %789 = vmatpush1.bf16.msra.mxu0 0
    %790 = vmatprep.mubr.bf16.mxu0 0
    %791 = vmatmul.mubr.bf16.gmra.mrb[0].mxu0 %v756
    %v792 = vpop.f32.mrb[0].mxu0
    %v793 = vadd.f32 0.0, %v792
    %v794 = vpop.f32.mrb[0].mxu0
    %v795 = vpop.f32.mrb[0].mxu0
    %v796 = vpop.f32.mrb[0].mxu0
    %797 = vdwg.mxu0
    %799 = vrot.lane.b32.xlu0 %v738, 32
    %v800 = vpop.permute.xlu0 %799
    %v805 = vunpack.c.l.b16 %v29
    %v806 = vunpack.c.l.b16 %v30
    %v807 = vunpack.c.l.b16 %v31
    %v808 = vunpack.c.l.b16 %v32
    %v809 = vpack.c.b16 %v806, %v805
    %v810 = vpack.c.b16 %v808, %v807
    %v814 = vsel %vm50, %v800, 0
    %816 = vmatprep.subr.bf16.mxu0 0
    %817 = vmatpush1.bf16.msra.mxu0 %v809
    %818 = vmatprep.subr.bf16.mxu0 0
    %819 = vmatpush1.bf16.msra.mxu0 %v810
    %820 = vmatprep.subr.bf16.mxu0 0
    %821 = vmatpush1.bf16.msra.mxu0 0
    %822 = vmatprep.subr.bf16.mxu0 0
    %823 = vmatpush1.bf16.msra.mxu0 0
    %824 = vmatprep.subr.bf16.mxu0 0
    %825 = vmatpush1.bf16.msra.mxu0 0
    %826 = vmatprep.subr.bf16.mxu0 0
    %827 = vmatpush1.bf16.msra.mxu0 0
    %828 = vmatprep.subr.bf16.mxu0 0
    %829 = vmatpush1.bf16.msra.mxu0 0
    %830 = vmatprep.subr.bf16.mxu0 0
    %831 = vmatpush1.bf16.msra.mxu0 0
    %832 = vmatprep.subr.bf16.mxu0 0
    %833 = vmatpush1.bf16.msra.mxu0 0
    %834 = vmatprep.subr.bf16.mxu0 0
    %835 = vmatpush1.bf16.msra.mxu0 0
    %836 = vmatprep.subr.bf16.mxu0 0
    %837 = vmatpush1.bf16.msra.mxu0 0
    %838 = vmatprep.subr.bf16.mxu0 0
    %839 = vmatpush1.bf16.msra.mxu0 0
    %840 = vmatprep.subr.bf16.mxu0 0
    %841 = vmatpush1.bf16.msra.mxu0 0
    %842 = vmatprep.subr.bf16.mxu0 0
    %843 = vmatpush1.bf16.msra.mxu0 0
    %844 = vmatprep.subr.bf16.mxu0 0
    %845 = vmatpush1.bf16.msra.mxu0 0
    %846 = vmatprep.subr.bf16.mxu0 0
    %847 = vmatpush1.bf16.msra.mxu0 0
    %848 = vmatprep.mubr.bf16.mxu0 0
    %849 = vmatmul.mubr.bf16.gmra.mrb[0].mxu0 %v814
    %v850 = vpop.f32.mrb[0].mxu0
    %v851 = vadd.f32 %v793, %v850
    %v852 = vpop.f32.mrb[0].mxu0
    %v853 = vpop.f32.mrb[0].mxu0
    %v854 = vpop.f32.mrb[0].mxu0
    %855 = vdwg.mxu0
    %v856 = vld [vmem:[%s5] sm:$0x1]
    %v858 = vlaneseq
    %v859 = vshrl.u32 %v858, 7
    %v860 = vsub.s32 0, %v859
    %v861 = vrot.slane %v856, %v860
    %v863 = vadd.f32 %v851, %v861
    %vm864 = vcmask 27648
    %v865 = vsel %vm864, %v863, -inf
    %866 = vmax.xlane.f32.xlu0 %v865
    %v867 = vpop.xlane.xlu0 %866
    %v868 = vsub.f32 %v863, %v867
    %v869 = vmul.f32 %v868, 1.442695
    %v870 = vpow.pop %v869
    %v871 = vsel %vm864, %v870, 0.0
    %872 = vadd.xlane.f32.xlu0 %v871
    %v873 = vpop.xlane.xlu0 %872
    %v874 = vrcp.pop %v873
    %v875 = vmul.f32 %v870, %v874
    %876 = vst.msk [vmem:[#allocation2] sm:$0xf] %vm864, %v875
    // Predicated region
    $region26: #{tpu_custom_call.1} parent=1 // pred_check
      _
    $region27: #{tpu_custom_call.1} parent=1 // pred_check_branch
      %878 = sbr.rel (0) target = $region29
    $region28: #{tpu_custom_call.1} parent=1 // pred_region
      %s880 = ssub.s32 64, 64
      %881 = vsyncadd [#allocation3], %s880
      %s883 = sshll.u32 [#allocation2], 4
      %s884 = int_to_ptr.vmem [resolvable:$true] %s883
      %886 = dma.vmem_to_hbm [thread:$0]  %s884, 64, %s6, [#allocation3]
    $region29: #{tpu_custom_call.1} parent=1 // pred_fallthru
      _
    // Predicated region
    $region30: #{tpu_custom_call.1} parent=1 // pred_check
      _
    $region31: #{tpu_custom_call.1} parent=1 // pred_check_branch
      %888 = sbr.rel (0) target = $region33
    $region32: #{tpu_custom_call.1} parent=1 // pred_region
      %889 = dma.done [#allocation3], 64
    $region33: #{tpu_custom_call.1} parent=1 // pred_fallthru
      _
    %890 = vsyncpa [#allocation3], 1

</llo_original>
